<compile_context>
chip_gen: v6e
topology: v6e:2x2x1
jax: 0.10.0
libtpu: 0.0.40
codegen_flags: <defaults>
</compile_context>

<pallas_src>
import jax
import jax.numpy as jnp
from jax.experimental import pallas as pl
from jax.experimental.pallas import tpu as pltpu

NUM_CLASSES = 80
HIDDEN = 32                       # logical head hidden width
HID_PAD = 128                     # hidden width padded to a full lane register
OUT_PAD = 128                     # fused cls(80)+reg(4)+ctr(1) padded to 128 lanes
POINT_STRIDES = (2, 4)            # small synthetic strides: 16x16 -> 8x8 and 4x4 levels
# matching regress_ranges ((0,64),(64,INF)) are loss-time metadata only, unused here.


def _fcos_head_kernel(feat_ref, w_bb_ref, b_bb_ref, w_br_ref, b_br_ref, out_ref):
    """Fused FCOS head for one row-tile of points.

    hidden = relu(feat @ W_bb + b_bb)     (VPU FMA for tiny c_in, MXU otherwise)
    out    = hidden @ W_branch + b_branch (single lane-dense MXU matmul, bf16 x bf16 -> f32)
    where W_branch packs [cls | reg | ctr | zero-pad] along 128 output lanes.
    Output is stored lane-dense in bf16 (the kernel is HBM-write-bound).
    """
    feat = feat_ref[...]                                     # (TM, c_in) bf16
    tm, c_in = feat.shape
    if c_in >= 16:
        # MXU path: overlaps with the branch matmul; avoids O(c_in) VALU chain.
        hidden = jnp.dot(feat, w_bb_ref[...].astype(jnp.bfloat16),
                         preferred_element_type=jnp.float32)
        hidden = hidden + b_bb_ref[...]
    else:
        # VPU broadcast-FMA path for tiny c_in (avoids a near-empty MXU K-pass).
        featf = feat.astype(jnp.float32)                     # f32 FMA: v5e-safe
        w_bb = w_bb_ref[...]                                 # (c_in, HID_PAD) f32
        hidden = jnp.broadcast_to(b_bb_ref[...], (tm, w_bb.shape[1]))
        for k in range(c_in):                                # c_in tiny & static
            hidden = hidden + featf[:, k:k + 1] * w_bb[k:k + 1, :]
    hidden = jnp.maximum(hidden, 0.0)                        # ReLU in f32 (VPU)

    # fused cls/reg/ctr branch: one (TM,128)x(128,128) MXU matmul, f32 accumulate
    out = jnp.dot(hidden.astype(jnp.bfloat16), w_br_ref[...],
                  preferred_element_type=jnp.float32)
    # bf16 store halves the dominant HBM write stream (unmasked 128-lane vst)
    out_ref[...] = (out + b_br_ref[...]).astype(jnp.bfloat16)


def _pack_params(params):
    """Pad hidden dim to HID_PAD and fuse the three branches into one weight/bias."""
    w_bb, b_bb, w_cls, b_cls, w_reg, b_reg, w_ctr, b_ctr = params
    c_in, hid = w_bb.shape

    w_bb_p = jnp.zeros((c_in, HID_PAD), jnp.float32).at[:, :hid].set(w_bb)
    b_bb_p = jnp.zeros((1, HID_PAD), jnp.float32).at[:, :hid].set(b_bb)

    w_br = jnp.zeros((HID_PAD, OUT_PAD), jnp.float32)
    w_br = w_br.at[:hid, :NUM_CLASSES].set(w_cls)
    w_br = w_br.at[:hid, NUM_CLASSES:NUM_CLASSES + 4].set(w_reg)
    w_br = w_br.at[:hid, NUM_CLASSES + 4:NUM_CLASSES + 5].set(w_ctr)

    b_br = jnp.zeros((1, OUT_PAD), jnp.float32)
    b_br = b_br.at[:, :NUM_CLASSES].set(b_cls)
    b_br = b_br.at[:, NUM_CLASSES:NUM_CLASSES + 4].set(b_reg)
    b_br = b_br.at[:, NUM_CLASSES + 4:NUM_CLASSES + 5].set(b_ctr)

    # branch matmul operand in bf16 (MXU); biases / FMA weights stay f32 (VPU path)
    return w_bb_p, b_bb_p, w_br.astype(jnp.bfloat16), b_br


def _choose_tm(p_total, tm_max=2048, min_tiles=4):
    """Pick (row_tile, padded_rows).

    Small problems: one tile covering all (16-aligned) rows -> zero per-step
    overhead and, when P is already 16-aligned, NO post-kernel row-slice copy.
    Large problems: tiles of ~tm_max but at least `min_tiles` grid steps so the
    two v7x TensorCores stay load-balanced (harmless on 1-TC v5e/v6e).
    Rows are 16-aligned for bf16 sublane packing.
    """
    p16 = -(-p_total // 16) * 16
    if p16 <= tm_max:
        return p16, p16
    tiles = max(min_tiles, -(-p16 // tm_max))
    tm = -(-p16 // tiles) // 16 * 16 + (16 if (-(-p16 // tiles)) % 16 else 0)
    tm = max(tm, 16)
    p_pad = -(-p16 // tm) * tm
    return tm, p_pad


def _run_head(flat_feat, packed, *, tm_max=2048):
    """flat_feat: (P_total, C_in) bf16 -> packed (P_total, OUT_PAD) bf16 slab."""
    p_total, c_in = flat_feat.shape
    tm, p_pad = _choose_tm(p_total, tm_max)
    if p_pad != p_total:
        flat_feat = jnp.pad(flat_feat, ((0, p_pad - p_total), (0, 0)))
    # TODO(synk): fuse the per-level pooling/permute/concat (synthetic backbone+neck)
    # into the kernel via scalar-prefetched level offsets to avoid the HBM round trip.
    # TODO(synk): lane-dense feature packing (transpose to (C,P) or fold C into
    # sublanes) once c_in grows enough for the (tm, c_in) feature DMA to matter.

    w_bb_p, b_bb_p, w_br, b_br = packed
    grid = p_pad // tm

    full = lambda shape: pl.BlockSpec(shape, lambda i: (0, 0))
    # useful (non-zero-padded) work for XLA's scheduler
    useful_n = NUM_CLASSES + 4 + 1
    flops = 2 * p_total * (c_in * HIDDEN + HIDDEN * useful_n)
    bytes_accessed = (p_total * c_in * 2                     # bf16 feature stream
                      + p_total * useful_n * 2               # useful bf16 output
                      + c_in * HID_PAD * 4 + HID_PAD * 4     # f32 projection params
                      + HID_PAD * OUT_PAD * 2 + OUT_PAD * 4) # bf16 branch W + f32 bias

    out = pl.pallas_call(
        _fcos_head_kernel,
        out_shape=jax.ShapeDtypeStruct((p_pad, OUT_PAD), jnp.bfloat16),
        grid_spec=pltpu.PrefetchScalarGridSpec(
            num_scalar_prefetch=0,
            grid=(grid,),
            in_specs=[
                pl.BlockSpec((tm, c_in), lambda i: (i, 0)),      # feature row tile
                full((c_in, HID_PAD)), full((1, HID_PAD)),       # hidden projection
                full((HID_PAD, OUT_PAD)), full((1, OUT_PAD)),    # fused cls/reg/ctr
            ],
            out_specs=pl.BlockSpec((tm, OUT_PAD), lambda i: (i, 0)),
        ),
        compiler_params=pltpu.CompilerParams(
            dimension_semantics=("parallel",)),
        cost_estimate=pl.CostEstimate(flops=flops, transcendentals=0,
                                      bytes_accessed=bytes_accessed),
    )(flat_feat, w_bb_p, b_bb_p, w_br, b_br)

    if p_pad != p_total:                 # only when P isn't 16-aligned
        out = out[:p_total]
    return out                           # packed bf16 slab; caller slices lazily


def fcos_forward(x, params):
    """FCOS.forward equivalent.

    x: (N, C, H, W) float32 (PyTorch NCHW convention)
    returns: classification (N, P, num_classes), regression (N, P, 4),
             centerness (N, P, 1), fmap_sizes dict; P = sum_l H_l*W_l.
    Outputs are bf16 (downstream sigmoid / score-threshold / NMS tolerant).
    """
    n, c, h, w = x.shape
    level_feats = []
    fmap_sizes = {}
    for i, s in enumerate(POINT_STRIDES):
        hl, wl = h // s, w // s
        # synthetic backbone+neck: stride-s average pooling (stays NCHW)
        pooled = x.reshape(n, c, hl, s, wl, s).mean(axis=(3, 5))
        fmap_sizes[i] = (hl, wl)
        # NCHW -> NHWC -> (N, H*W, C)   (exactly FCOS.forward's permute+reshape)
        pooled = jnp.transpose(pooled, (0, 2, 3, 1)).reshape(n, hl * wl, c)
        level_feats.append(pooled)

    feat_all = jnp.concatenate(level_feats, axis=1)          # (N, P, C) concat on dim=1
    p = feat_all.shape[1]
    flat = feat_all.reshape(n * p, c).astype(jnp.bfloat16)   # bf16 feature stream

    packed = _pack_params(params)
    slab = _run_head(flat, packed).reshape(n, p, OUT_PAD)    # packed bf16 slab

    # lazy channel slices on the bf16 slab (XLA fuses these into consumers)
    cls_o = slab[:, :, :NUM_CLASSES]
    reg_o = slab[:, :, NUM_CLASSES:NUM_CLASSES + 4]
    ctr_o = slab[:, :, NUM_CLASSES + 4:NUM_CLASSES + 5]
    return cls_o, reg_o, ctr_o, fmap_sizes


def init_params(key, c_in):
    ks = jax.random.split(key, 8)
    scale = 0.1
    w_bb = scale * jax.random.normal(ks[0], (c_in, HIDDEN), jnp.float32)
    b_bb = scale * jax.random.normal(ks[1], (1, HIDDEN), jnp.float32)
    w_cls = scale * jax.random.normal(ks[2], (HIDDEN, NUM_CLASSES), jnp.float32)
    b_cls = scale * jax.random.normal(ks[3], (1, NUM_CLASSES), jnp.float32)
    w_reg = scale * jax.random.normal(ks[4], (HIDDEN, 4), jnp.float32)
    b_reg = scale * jax.random.normal(ks[5], (1, 4), jnp.float32)
    w_ctr = scale * jax.random.normal(ks[6], (HIDDEN, 1), jnp.float32)
    b_ctr = scale * jax.random.normal(ks[7], (1, 1), jnp.float32)
    return (w_bb, b_bb, w_cls, b_cls, w_reg, b_reg, w_ctr, b_ctr)


def _reference(x, params):
    """Pure-JAX f32 reference of the same synthetic FCOS forward."""
    n, c, h, w = x.shape
    feats = []
    for s in POINT_STRIDES:
        hl, wl = h // s, w // s
        pooled = x.reshape(n, c, hl, s, wl, s).mean(axis=(3, 5))
        feats.append(jnp.transpose(pooled, (0, 2, 3, 1)).reshape(n, hl * wl, c))
    feat = jnp.concatenate(feats, axis=1)
    w_bb, b_bb, w_cls, b_cls, w_reg, b_reg, w_ctr, b_ctr = params
    hid = jnp.maximum(feat @ w_bb + b_bb, 0.0)
    return hid @ w_cls + b_cls, hid @ w_reg + b_reg, hid @ w_ctr + b_ctr


if __name__ == "__main__":
    key = jax.random.PRNGKey(0)
    kx, kp = jax.random.split(key)

    x = jax.random.normal(kx, (2, 4, 16, 16), jnp.float32)   # N=2, C=4, H=W=16 (NCHW)
    params = init_params(kp, c_in=4)

    cls_t, reg_t, ctr_t, fmap_sizes = jax.jit(fcos_forward)(x, params)
    jax.block_until_ready((cls_t, reg_t, ctr_t))

    # sanity against pure-JAX f32 reference (kernel uses bf16 matmul operands and
    # a bf16 output store, f32 accumulation -> loosened tolerance)
    cls_r, reg_r, ctr_r = _reference(x, params)
    P = 8 * 8 + 4 * 4
    assert cls_t.shape == (2, P, NUM_CLASSES)
    assert reg_t.shape == (2, P, 4)
    assert ctr_t.shape == (2, P, 1)
    assert fmap_sizes == {0: (8, 8), 1: (4, 4)}
    assert jnp.allclose(cls_t.astype(jnp.float32), cls_r, atol=2e-2, rtol=2e-2)
    assert jnp.allclose(reg_t.astype(jnp.float32), reg_r, atol=2e-2, rtol=2e-2)
    assert jnp.allclose(ctr_t.astype(jnp.float32), ctr_r, atol=2e-2, rtol=2e-2)

    # TODO(synk): get_loss / get_results (target assignment, NMS) are training /
    # post-processing paths, not part of forward(); not implemented in Pallas.

    print("KERNEL_OK")
</pallas_src>

<mosaic_0001>
module attributes {stable_mosaic.version = 11 : i64} {
  func.func @_fcos_head_kernel(%arg0: i32, %arg1: memref<160x4xbf16, #tpu.memory_space<vmem>>, %arg2: memref<4x128xf32, #tpu.memory_space<vmem>>, %arg3: memref<1x128xf32, #tpu.memory_space<vmem>>, %arg4: memref<128x128xbf16, #tpu.memory_space<vmem>>, %arg5: memref<1x128xf32, #tpu.memory_space<vmem>>, %arg6: memref<160x128xbf16, #tpu.memory_space<vmem>>) attributes {dimension_semantics = [#tpu.dimension_semantics<parallel>], iteration_bounds = array<i64: 1>, scalar_prefetch = 0 : i64, scratch_operands = 0 : i64, tpu.core_type = #tpu.core_type<tc>, window_params = [{transform_indices = @transform_0, window_bounds = array<i64: 160, 4>}, {pipeline_mode = #tpu.pipeline_mode<synchronous>, transform_indices = @transform_1, window_bounds = array<i64: 4, 128>}, {pipeline_mode = #tpu.pipeline_mode<synchronous>, transform_indices = @transform_2, window_bounds = array<i64: 1, 128>}, {pipeline_mode = #tpu.pipeline_mode<synchronous>, transform_indices = @transform_3, window_bounds = array<i64: 128, 128>}, {pipeline_mode = #tpu.pipeline_mode<synchronous>, transform_indices = @transform_4, window_bounds = array<i64: 1, 128>}, {transform_indices = @transform_5, window_bounds = array<i64: 160, 128>}]} {
    %c0 = arith.constant 0 : index
    %c0_0 = arith.constant 0 : index
    %0 = vector.load %arg1[%c0, %c0_0] : memref<160x4xbf16, #tpu.memory_space<vmem>>, vector<160x4xbf16>
    %1 = arith.extf %0 : vector<160x4xbf16> to vector<160x4xf32>
    %c0_1 = arith.constant 0 : index
    %c0_2 = arith.constant 0 : index
    %2 = vector.load %arg2[%c0_1, %c0_2] : memref<4x128xf32, #tpu.memory_space<vmem>>, vector<4x128xf32>
    %c0_3 = arith.constant 0 : index
    %c0_4 = arith.constant 0 : index
    %3 = vector.load %arg3[%c0_3, %c0_4] : memref<1x128xf32, #tpu.memory_space<vmem>>, vector<1x128xf32>
    %4 = vector.shape_cast %3 : vector<1x128xf32> to vector<1x128xf32>
    %5 = vector.broadcast %4 : vector<1x128xf32> to vector<160x128xf32>
    %6 = vector.extract_strided_slice %1 {offsets = [0, 0], sizes = [160, 1], strides = [1, 1]} : vector<160x4xf32> to vector<160x1xf32>
    %7 = vector.extract_strided_slice %2 {offsets = [0, 0], sizes = [1, 128], strides = [1, 1]} : vector<4x128xf32> to vector<1x128xf32>
    %8 = vector.broadcast %6 : vector<160x1xf32> to vector<160x128xf32>
    %9 = vector.broadcast %7 : vector<1x128xf32> to vector<160x128xf32>
    %10 = arith.mulf %8, %9 : vector<160x128xf32>
    %11 = arith.addf %5, %10 : vector<160x128xf32>
    %12 = vector.extract_strided_slice %1 {offsets = [0, 1], sizes = [160, 1], strides = [1, 1]} : vector<160x4xf32> to vector<160x1xf32>
    %13 = vector.extract_strided_slice %2 {offsets = [1, 0], sizes = [1, 128], strides = [1, 1]} : vector<4x128xf32> to vector<1x128xf32>
    %14 = vector.broadcast %12 : vector<160x1xf32> to vector<160x128xf32>
    %15 = vector.broadcast %13 : vector<1x128xf32> to vector<160x128xf32>
    %16 = arith.mulf %14, %15 : vector<160x128xf32>
    %17 = arith.addf %11, %16 : vector<160x128xf32>
    %18 = vector.extract_strided_slice %1 {offsets = [0, 2], sizes = [160, 1], strides = [1, 1]} : vector<160x4xf32> to vector<160x1xf32>
    %19 = vector.extract_strided_slice %2 {offsets = [2, 0], sizes = [1, 128], strides = [1, 1]} : vector<4x128xf32> to vector<1x128xf32>
    %20 = vector.broadcast %18 : vector<160x1xf32> to vector<160x128xf32>
    %21 = vector.broadcast %19 : vector<1x128xf32> to vector<160x128xf32>
    %22 = arith.mulf %20, %21 : vector<160x128xf32>
    %23 = arith.addf %17, %22 : vector<160x128xf32>
    %24 = vector.extract_strided_slice %1 {offsets = [0, 3], sizes = [160, 1], strides = [1, 1]} : vector<160x4xf32> to vector<160x1xf32>
    %25 = vector.extract_strided_slice %2 {offsets = [3, 0], sizes = [1, 128], strides = [1, 1]} : vector<4x128xf32> to vector<1x128xf32>
    %26 = vector.broadcast %24 : vector<160x1xf32> to vector<160x128xf32>
    %27 = vector.broadcast %25 : vector<1x128xf32> to vector<160x128xf32>
    %28 = arith.mulf %26, %27 : vector<160x128xf32>
    %29 = arith.addf %23, %28 : vector<160x128xf32>
    %cst = arith.constant 0.000000e+00 : f32
    %30 = vector.broadcast %cst : f32 to vector<160x128xf32>
    %31 = arith.maximumf %29, %30 : vector<160x128xf32>
    %32 = arith.truncf %31 : vector<160x128xf32> to vector<160x128xbf16>
    %c0_5 = arith.constant 0 : index
    %c0_6 = arith.constant 0 : index
    %33 = vector.load %arg4[%c0_5, %c0_6] : memref<128x128xbf16, #tpu.memory_space<vmem>>, vector<128x128xbf16>
    %cst_7 = arith.constant dense<0.000000e+00> : vector<160x128xf32>
    %34 = tpu.matmul %32, %33, %cst_7 {dimension_numbers = #tpu.dot_dimension_numbers<[1], [0], [0], [1], [0, 0, 1, 1], [], []>} : vector<160x128xbf16>, vector<128x128xbf16>, vector<160x128xf32> -> vector<160x128xf32>
    %c0_8 = arith.constant 0 : index
    %c0_9 = arith.constant 0 : index
    %35 = vector.load %arg5[%c0_8, %c0_9] : memref<1x128xf32, #tpu.memory_space<vmem>>, vector<1x128xf32>
    %36 = vector.broadcast %35 : vector<1x128xf32> to vector<160x128xf32>
    %37 = arith.addf %34, %36 : vector<160x128xf32>
    %38 = arith.truncf %37 : vector<160x128xf32> to vector<160x128xbf16>
    %c0_10 = arith.constant 0 : index
    %c0_11 = arith.constant 0 : index
    %39 = vector.load %arg6[%c0_10, %c0_11] : memref<160x128xbf16, #tpu.memory_space<vmem>>, vector<160x128xbf16>
    tpu.vector_store %arg6[%c0_10, %c0_11], %38 {strides = array<i32>} : memref<160x128xbf16, #tpu.memory_space<vmem>>, vector<160x128xbf16>,
    return
  }
  func.func @transform_0(%arg0: i32) -> (i32, i32) {
    %c0_i32 = arith.constant 0 : i32
    %c0_i32_0 = arith.constant 0 : i32
    return %arg0, %c0_i32 : i32, i32
  }
  func.func @transform_1(%arg0: i32) -> (i32, i32) {
    %c0_i32 = arith.constant 0 : i32
    %c0_i32_0 = arith.constant 0 : i32
    %c0_i32_1 = arith.constant 0 : i32
    return %c0_i32, %c0_i32_0 : i32, i32
  }
  func.func @transform_2(%arg0: i32) -> (i32, i32) {
    %c0_i32 = arith.constant 0 : i32
    %c0_i32_0 = arith.constant 0 : i32
    %c0_i32_1 = arith.constant 0 : i32
    return %c0_i32, %c0_i32_0 : i32, i32
  }
  func.func @transform_3(%arg0: i32) -> (i32, i32) {
    %c0_i32 = arith.constant 0 : i32
    %c0_i32_0 = arith.constant 0 : i32
    %c0_i32_1 = arith.constant 0 : i32
    return %c0_i32, %c0_i32_0 : i32, i32
  }
  func.func @transform_4(%arg0: i32) -> (i32, i32) {
    %c0_i32 = arith.constant 0 : i32
    %c0_i32_0 = arith.constant 0 : i32
    %c0_i32_1 = arith.constant 0 : i32
    return %c0_i32, %c0_i32_0 : i32, i32
  }
  func.func @transform_5(%arg0: i32) -> (i32, i32) {
    %c0_i32 = arith.constant 0 : i32
    %c0_i32_0 = arith.constant 0 : i32
    return %arg0, %c0_i32 : i32, i32
  }
}

</mosaic_0001>

<llo_original>
// kernel: fcos_forward.1
$region0: #{fcos_forward.1}
  #allocation0 [shape = 'u32[]', space=smem, size = 0x4, offset = 0x4, fixed_abs, tag = 'smem constant byte address 0x4 - core index']
  #allocation1 [shape = 'u32[144,128]{1,0:T(1,128)}', space=vmem, size = 0x12000, scoped, tag = 'internal scratch']
  %s0 = inlined_call_operand.vmem [shape: bf16[160,4], index: 0, kind: input, shape index: {}]
  %s1 = inlined_call_operand.vmem [shape: f32[4,128], index: 1, kind: input, shape index: {}]
  %s2 = inlined_call_operand.vmem [shape: f32[1,128], index: 2, kind: input, shape index: {}]
  %s3 = inlined_call_operand.vmem [shape: bf16[128,128], index: 3, kind: input, shape index: {}]
  %s4 = inlined_call_operand.vmem [shape: f32[1,128], index: 4, kind: input, shape index: {}]
  %s5 = inlined_call_operand.vmem [shape: bf16[160,128], index: 5, kind: output, shape index: {}]
  %s6 = sld [smem:[#allocation0]]
  $region30: #{fcos_forward.1} parent=0
    _
  %s8 = ssub.s32 1, %s6
  %s9 = scalar_select 0, %s8, %s6
  // Predicated region
  $region2: #{fcos_forward.1} parent=0 // pred_check
    _
  $region3: #{fcos_forward.1} parent=0 // pred_check_branch
    %11 = sbr.rel (0) target = $region5
  $region4: #{fcos_forward.1} parent=0 // pred_region
    _
  $region5: #{fcos_forward.1} parent=0 // pred_fallthru
    _
  // Predicated region
  $region6: #{fcos_forward.1} parent=0 // pred_check
    _
  $region7: #{fcos_forward.1} parent=0 // pred_check_branch
    %13 = sbr.rel (0) target = $region9
  $region8: #{fcos_forward.1} parent=0 // pred_region
    _
  $region9: #{fcos_forward.1} parent=0 // pred_fallthru
    _
  // Predicated region
  $region10: #{fcos_forward.1} parent=0 // pred_check
    _
  $region11: #{fcos_forward.1} parent=0 // pred_check_branch
    %15 = sbr.rel (0) target = $region13
  $region12: #{fcos_forward.1} parent=0 // pred_region
    _
  $region13: #{fcos_forward.1} parent=0 // pred_fallthru
    _
  // Predicated region
  $region14: #{fcos_forward.1} parent=0 // pred_check
    _
  $region15: #{fcos_forward.1} parent=0 // pred_check_branch
    %17 = sbr.rel (0) target = $region17
  $region16: #{fcos_forward.1} parent=0 // pred_region
    _
  $region17: #{fcos_forward.1} parent=0 // pred_fallthru
    _
  // Predicated region
  $region18: #{fcos_forward.1} parent=0 // pred_check
    _
  $region19: #{fcos_forward.1} parent=0 // pred_check_branch
    %19 = sbr.rel (0) target = $region21
  $region20: #{fcos_forward.1} parent=0 // pred_region
    _
  $region21: #{fcos_forward.1} parent=0 // pred_fallthru
    _
  %v21 = vld [vmem:[%s0] sm:$0xf]
  %v22 = vld [vmem:[%s0 + $0x4] sm:$0xf]
  %v23 = vld [vmem:[%s0 + $0x8] sm:$0xf]
  %v24 = vld [vmem:[%s0 + $0xc] sm:$0xf]
  %v25 = vld [vmem:[%s0 + $0x10] sm:$0xf]
  %v26 = vld [vmem:[%s0 + $0x14] sm:$0xf]
  %v27 = vld [vmem:[%s0 + $0x18] sm:$0xf]
  %v28 = vld [vmem:[%s0 + $0x1c] sm:$0xf]
  %v29 = vld [vmem:[%s0 + $0x20] sm:$0xf]
  %v30 = vld [vmem:[%s0 + $0x24] sm:$0xf]
  %v31 = vld [vmem:[%s0 + $0x28] sm:$0xf]
  %v32 = vld [vmem:[%s0 + $0x2c] sm:$0xf]
  %v33 = vld [vmem:[%s0 + $0x30] sm:$0xf]
  %v34 = vld [vmem:[%s0 + $0x34] sm:$0xf]
  %v35 = vld [vmem:[%s0 + $0x38] sm:$0xf]
  %v36 = vld [vmem:[%s0 + $0x3c] sm:$0xf]
  %v37 = vld [vmem:[%s0 + $0x40] sm:$0xf]
  %v38 = vld [vmem:[%s0 + $0x44] sm:$0xf]
  %v39 = vld [vmem:[%s0 + $0x48] sm:$0xf]
  %v40 = vld [vmem:[%s0 + $0x4c] sm:$0xf]
  %v41 = vunpack.c.l.bf16 %v21
  %v42 = vunpack.c.l.bf16 %v22
  %v43 = vunpack.c.l.bf16 %v23
  %v44 = vunpack.c.l.bf16 %v24
  %v45 = vunpack.c.l.bf16 %v25
  %v46 = vunpack.c.l.bf16 %v26
  %v47 = vunpack.c.l.bf16 %v27
  %v48 = vunpack.c.l.bf16 %v28
  %v49 = vunpack.c.l.bf16 %v29
  %v50 = vunpack.c.l.bf16 %v30
  %v51 = vunpack.c.l.bf16 %v31
  %v52 = vunpack.c.l.bf16 %v32
  %v53 = vunpack.c.l.bf16 %v33
  %v54 = vunpack.c.l.bf16 %v34
  %v55 = vunpack.c.l.bf16 %v35
  %v56 = vunpack.c.l.bf16 %v36
  %v57 = vunpack.c.l.bf16 %v37
  %v58 = vunpack.c.l.bf16 %v38
  %v59 = vunpack.c.l.bf16 %v39
  %v60 = vunpack.c.l.bf16 %v40
  %v61 = vld [vmem:[%s1] sm:$0xf]
  %v62 = vld [vmem:[%s2] sm:$0x1]
  %v64 = vlaneseq
  %v65 = vshrl.u32 %v64, 7
  %v66 = vsub.s32 0, %v65
  %v67 = vrot.slane %v62, %v66
  %70 = vset.pattern.permute.xlu0 0
  %71 = vperm.xlu0 %70, %v41
  %v72 = vpop.permute.xlu0 %71
  %75 = vset.pattern.permute.xlu0 0
  %76 = vperm.xlu0 %75, %v42
  %v77 = vpop.permute.xlu0 %76
  %80 = vset.pattern.permute.xlu0 0
  %81 = vperm.xlu0 %80, %v43
  %v82 = vpop.permute.xlu0 %81
  %85 = vset.pattern.permute.xlu0 0
  %86 = vperm.xlu0 %85, %v44
  %v87 = vpop.permute.xlu0 %86
  %90 = vset.pattern.permute.xlu0 0
  %91 = vperm.xlu0 %90, %v45
  %v92 = vpop.permute.xlu0 %91
  %95 = vset.pattern.permute.xlu0 0
  %96 = vperm.xlu0 %95, %v46
  %v97 = vpop.permute.xlu0 %96
  %100 = vset.pattern.permute.xlu0 0
  %101 = vperm.xlu0 %100, %v47
  %v102 = vpop.permute.xlu0 %101
  %105 = vset.pattern.permute.xlu0 0
  %106 = vperm.xlu0 %105, %v48
  %v107 = vpop.permute.xlu0 %106
  %110 = vset.pattern.permute.xlu0 0
  %111 = vperm.xlu0 %110, %v49
  %v112 = vpop.permute.xlu0 %111
  %115 = vset.pattern.permute.xlu0 0
  %116 = vperm.xlu0 %115, %v50
  %v117 = vpop.permute.xlu0 %116
  %120 = vset.pattern.permute.xlu0 0
  %121 = vperm.xlu0 %120, %v51
  %v122 = vpop.permute.xlu0 %121
  %125 = vset.pattern.permute.xlu0 0
  %126 = vperm.xlu0 %125, %v52
  %v127 = vpop.permute.xlu0 %126
  %130 = vset.pattern.permute.xlu0 0
  %131 = vperm.xlu0 %130, %v53
  %v132 = vpop.permute.xlu0 %131
  %135 = vset.pattern.permute.xlu0 0
  %136 = vperm.xlu0 %135, %v54
  %v137 = vpop.permute.xlu0 %136
  %140 = vset.pattern.permute.xlu0 0
  %141 = vperm.xlu0 %140, %v55
  %v142 = vpop.permute.xlu0 %141
  %145 = vset.pattern.permute.xlu0 0
  %146 = vperm.xlu0 %145, %v56
  %v147 = vpop.permute.xlu0 %146
  %150 = vset.pattern.permute.xlu0 0
  %151 = vperm.xlu0 %150, %v57
  %v152 = vpop.permute.xlu0 %151
  %155 = vset.pattern.permute.xlu0 0
  %156 = vperm.xlu0 %155, %v58
  %v157 = vpop.permute.xlu0 %156
  %160 = vset.pattern.permute.xlu0 0
  %161 = vperm.xlu0 %160, %v59
  %v162 = vpop.permute.xlu0 %161
  %165 = vset.pattern.permute.xlu0 0
  %166 = vperm.xlu0 %165, %v60
  %v167 = vpop.permute.xlu0 %166
  %v169 = vlaneseq
  %v170 = vshrl.u32 %v169, 7
  %v171 = vsub.s32 0, %v170
  %v172 = vrot.slane %v61, %v171
  %v173 = vmul.f32 %v72, %v172
  %v174 = vmul.f32 %v77, %v172
  %v175 = vmul.f32 %v82, %v172
  %v176 = vmul.f32 %v87, %v172
  %v177 = vmul.f32 %v92, %v172
  %v178 = vmul.f32 %v97, %v172
  %v179 = vmul.f32 %v102, %v172
  %v180 = vmul.f32 %v107, %v172
  %v181 = vmul.f32 %v112, %v172
  %v182 = vmul.f32 %v117, %v172
  %v183 = vmul.f32 %v122, %v172
  %v184 = vmul.f32 %v127, %v172
  %v185 = vmul.f32 %v132, %v172
  %v186 = vmul.f32 %v137, %v172
  %v187 = vmul.f32 %v142, %v172
  %v188 = vmul.f32 %v147, %v172
  %v189 = vmul.f32 %v152, %v172
  %v190 = vmul.f32 %v157, %v172
  %v191 = vmul.f32 %v162, %v172
  %v192 = vmul.f32 %v167, %v172
  %v193 = vadd.f32 %v67, %v173
  %v194 = vadd.f32 %v67, %v174
  %v195 = vadd.f32 %v67, %v175
  %v196 = vadd.f32 %v67, %v176
  %v197 = vadd.f32 %v67, %v177
  %v198 = vadd.f32 %v67, %v178
  %v199 = vadd.f32 %v67, %v179
  %v200 = vadd.f32 %v67, %v180
  %v201 = vadd.f32 %v67, %v181
  %v202 = vadd.f32 %v67, %v182
  %v203 = vadd.f32 %v67, %v183
  %v204 = vadd.f32 %v67, %v184
  %v205 = vadd.f32 %v67, %v185
  %v206 = vadd.f32 %v67, %v186
  %v207 = vadd.f32 %v67, %v187
  %v208 = vadd.f32 %v67, %v188
  %v209 = vadd.f32 %v67, %v189
  %v210 = vadd.f32 %v67, %v190
  %v211 = vadd.f32 %v67, %v191
  %v212 = vadd.f32 %v67, %v192
  %213 = vset.pattern.permute.xlu0 1
  %214 = vperm.xlu0 %213, %v41
  %v215 = vpop.permute.xlu0 %214
  %217 = vset.pattern.permute.xlu0 1
  %218 = vperm.xlu0 %217, %v42
  %v219 = vpop.permute.xlu0 %218
  %221 = vset.pattern.permute.xlu0 1
  %222 = vperm.xlu0 %221, %v43
  %v223 = vpop.permute.xlu0 %222
  %225 = vset.pattern.permute.xlu0 1
  %226 = vperm.xlu0 %225, %v44
  %v227 = vpop.permute.xlu0 %226
  %229 = vset.pattern.permute.xlu0 1
  %230 = vperm.xlu0 %229, %v45
  %v231 = vpop.permute.xlu0 %230
  %233 = vset.pattern.permute.xlu0 1
  %234 = vperm.xlu0 %233, %v46
  %v235 = vpop.permute.xlu0 %234
  %237 = vset.pattern.permute.xlu0 1
  %238 = vperm.xlu0 %237, %v47
  %v239 = vpop.permute.xlu0 %238
  %241 = vset.pattern.permute.xlu0 1
  %242 = vperm.xlu0 %241, %v48
  %v243 = vpop.permute.xlu0 %242
  %245 = vset.pattern.permute.xlu0 1
  %246 = vperm.xlu0 %245, %v49
  %v247 = vpop.permute.xlu0 %246
  %249 = vset.pattern.permute.xlu0 1
  %250 = vperm.xlu0 %249, %v50
  %v251 = vpop.permute.xlu0 %250
  %253 = vset.pattern.permute.xlu0 1
  %254 = vperm.xlu0 %253, %v51
  %v255 = vpop.permute.xlu0 %254
  %257 = vset.pattern.permute.xlu0 1
  %258 = vperm.xlu0 %257, %v52
  %v259 = vpop.permute.xlu0 %258
  %261 = vset.pattern.permute.xlu0 1
  %262 = vperm.xlu0 %261, %v53
  %v263 = vpop.permute.xlu0 %262
  %265 = vset.pattern.permute.xlu0 1
  %266 = vperm.xlu0 %265, %v54
  %v267 = vpop.permute.xlu0 %266
  %269 = vset.pattern.permute.xlu0 1
  %270 = vperm.xlu0 %269, %v55
  %v271 = vpop.permute.xlu0 %270
  %273 = vset.pattern.permute.xlu0 1
  %274 = vperm.xlu0 %273, %v56
  %v275 = vpop.permute.xlu0 %274
  %277 = vset.pattern.permute.xlu0 1
  %278 = vperm.xlu0 %277, %v57
  %v279 = vpop.permute.xlu0 %278
  %281 = vset.pattern.permute.xlu0 1
  %282 = vperm.xlu0 %281, %v58
  %v283 = vpop.permute.xlu0 %282
  %285 = vset.pattern.permute.xlu0 1
  %286 = vperm.xlu0 %285, %v59
  %v287 = vpop.permute.xlu0 %286
  %289 = vset.pattern.permute.xlu0 1
  %290 = vperm.xlu0 %289, %v60
  %v291 = vpop.permute.xlu0 %290
  %v293 = vlaneseq
  %v294 = vshrl.u32 %v293, 7
  %v295 = vsub.s32 1, %v294
  %v296 = vrot.slane %v61, %v295
  %v297 = vmul.f32 %v215, %v296
  %v298 = vmul.f32 %v219, %v296
  %v299 = vmul.f32 %v223, %v296
  %v300 = vmul.f32 %v227, %v296
  %v301 = vmul.f32 %v231, %v296
  %v302 = vmul.f32 %v235, %v296
  %v303 = vmul.f32 %v239, %v296
  %v304 = vmul.f32 %v243, %v296
  %v305 = vmul.f32 %v247, %v296
  %v306 = vmul.f32 %v251, %v296
  %v307 = vmul.f32 %v255, %v296
  %v308 = vmul.f32 %v259, %v296
  %v309 = vmul.f32 %v263, %v296
  %v310 = vmul.f32 %v267, %v296
  %v311 = vmul.f32 %v271, %v296
  %v312 = vmul.f32 %v275, %v296
  %v313 = vmul.f32 %v279, %v296
  %v314 = vmul.f32 %v283, %v296
  %v315 = vmul.f32 %v287, %v296
  %v316 = vmul.f32 %v291, %v296
  %v317 = vadd.f32 %v193, %v297
  %v318 = vadd.f32 %v194, %v298
  %v319 = vadd.f32 %v195, %v299
  %v320 = vadd.f32 %v196, %v300
  %v321 = vadd.f32 %v197, %v301
  %v322 = vadd.f32 %v198, %v302
  %v323 = vadd.f32 %v199, %v303
  %v324 = vadd.f32 %v200, %v304
  %v325 = vadd.f32 %v201, %v305
  %v326 = vadd.f32 %v202, %v306
  %v327 = vadd.f32 %v203, %v307
  %v328 = vadd.f32 %v204, %v308
  %v329 = vadd.f32 %v205, %v309
  %v330 = vadd.f32 %v206, %v310
  %v331 = vadd.f32 %v207, %v311
  %v332 = vadd.f32 %v208, %v312
  %v333 = vadd.f32 %v209, %v313
  %v334 = vadd.f32 %v210, %v314
  %v335 = vadd.f32 %v211, %v315
  %v336 = vadd.f32 %v212, %v316
  %337 = vset.pattern.permute.xlu0 2
  %338 = vperm.xlu0 %337, %v41
  %v339 = vpop.permute.xlu0 %338
  %341 = vset.pattern.permute.xlu0 2
  %342 = vperm.xlu0 %341, %v42
  %v343 = vpop.permute.xlu0 %342
  %345 = vset.pattern.permute.xlu0 2
  %346 = vperm.xlu0 %345, %v43
  %v347 = vpop.permute.xlu0 %346
  %349 = vset.pattern.permute.xlu0 2
  %350 = vperm.xlu0 %349, %v44
  %v351 = vpop.permute.xlu0 %350
  %353 = vset.pattern.permute.xlu0 2
  %354 = vperm.xlu0 %353, %v45
  %v355 = vpop.permute.xlu0 %354
  %357 = vset.pattern.permute.xlu0 2
  %358 = vperm.xlu0 %357, %v46
  %v359 = vpop.permute.xlu0 %358
  %361 = vset.pattern.permute.xlu0 2
  %362 = vperm.xlu0 %361, %v47
  %v363 = vpop.permute.xlu0 %362
  %365 = vset.pattern.permute.xlu0 2
  %366 = vperm.xlu0 %365, %v48
  %v367 = vpop.permute.xlu0 %366
  %369 = vset.pattern.permute.xlu0 2
  %370 = vperm.xlu0 %369, %v49
  %v371 = vpop.permute.xlu0 %370
  %373 = vset.pattern.permute.xlu0 2
  %374 = vperm.xlu0 %373, %v50
  %v375 = vpop.permute.xlu0 %374
  %377 = vset.pattern.permute.xlu0 2
  %378 = vperm.xlu0 %377, %v51
  %v379 = vpop.permute.xlu0 %378
  %381 = vset.pattern.permute.xlu0 2
  %382 = vperm.xlu0 %381, %v52
  %v383 = vpop.permute.xlu0 %382
  %385 = vset.pattern.permute.xlu0 2
  %386 = vperm.xlu0 %385, %v53
  %v387 = vpop.permute.xlu0 %386
  %389 = vset.pattern.permute.xlu0 2
  %390 = vperm.xlu0 %389, %v54
  %v391 = vpop.permute.xlu0 %390
  %393 = vset.pattern.permute.xlu0 2
  %394 = vperm.xlu0 %393, %v55
  %v395 = vpop.permute.xlu0 %394
  %397 = vset.pattern.permute.xlu0 2
  %398 = vperm.xlu0 %397, %v56
  %v399 = vpop.permute.xlu0 %398
  %401 = vset.pattern.permute.xlu0 2
  %402 = vperm.xlu0 %401, %v57
  %v403 = vpop.permute.xlu0 %402
  %405 = vset.pattern.permute.xlu0 2
  %406 = vperm.xlu0 %405, %v58
  %v407 = vpop.permute.xlu0 %406
  %409 = vset.pattern.permute.xlu0 2
  %410 = vperm.xlu0 %409, %v59
  %v411 = vpop.permute.xlu0 %410
  %413 = vset.pattern.permute.xlu0 2
  %414 = vperm.xlu0 %413, %v60
  %v415 = vpop.permute.xlu0 %414
  %v417 = vlaneseq
  %v418 = vshrl.u32 %v417, 7
  %v419 = vsub.s32 2, %v418
  %v420 = vrot.slane %v61, %v419
  %v421 = vmul.f32 %v339, %v420
  %v422 = vmul.f32 %v343, %v420
  %v423 = vmul.f32 %v347, %v420
  %v424 = vmul.f32 %v351, %v420
  %v425 = vmul.f32 %v355, %v420
  %v426 = vmul.f32 %v359, %v420
  %v427 = vmul.f32 %v363, %v420
  %v428 = vmul.f32 %v367, %v420
  %v429 = vmul.f32 %v371, %v420
  %v430 = vmul.f32 %v375, %v420
  %v431 = vmul.f32 %v379, %v420
  %v432 = vmul.f32 %v383, %v420
  %v433 = vmul.f32 %v387, %v420
  %v434 = vmul.f32 %v391, %v420
  %v435 = vmul.f32 %v395, %v420
  %v436 = vmul.f32 %v399, %v420
  %v437 = vmul.f32 %v403, %v420
  %v438 = vmul.f32 %v407, %v420
  %v439 = vmul.f32 %v411, %v420
  %v440 = vmul.f32 %v415, %v420
  %v441 = vadd.f32 %v317, %v421
  %v442 = vadd.f32 %v318, %v422
  %v443 = vadd.f32 %v319, %v423
  %v444 = vadd.f32 %v320, %v424
  %v445 = vadd.f32 %v321, %v425
  %v446 = vadd.f32 %v322, %v426
  %v447 = vadd.f32 %v323, %v427
  %v448 = vadd.f32 %v324, %v428
  %v449 = vadd.f32 %v325, %v429
  %v450 = vadd.f32 %v326, %v430
  %v451 = vadd.f32 %v327, %v431
  %v452 = vadd.f32 %v328, %v432
  %v453 = vadd.f32 %v329, %v433
  %v454 = vadd.f32 %v330, %v434
  %v455 = vadd.f32 %v331, %v435
  %v456 = vadd.f32 %v332, %v436
  %v457 = vadd.f32 %v333, %v437
  %v458 = vadd.f32 %v334, %v438
  %v459 = vadd.f32 %v335, %v439
  %v460 = vadd.f32 %v336, %v440
  %461 = vset.pattern.permute.xlu0 3
  %462 = vperm.xlu0 %461, %v41
  %v463 = vpop.permute.xlu0 %462
  %465 = vset.pattern.permute.xlu0 3
  %466 = vperm.xlu0 %465, %v42
  %v467 = vpop.permute.xlu0 %466
  %469 = vset.pattern.permute.xlu0 3
  %470 = vperm.xlu0 %469, %v43
  %v471 = vpop.permute.xlu0 %470
  %473 = vset.pattern.permute.xlu0 3
  %474 = vperm.xlu0 %473, %v44
  %v475 = vpop.permute.xlu0 %474
  %477 = vset.pattern.permute.xlu0 3
  %478 = vperm.xlu0 %477, %v45
  %v479 = vpop.permute.xlu0 %478
  %481 = vset.pattern.permute.xlu0 3
  %482 = vperm.xlu0 %481, %v46
  %v483 = vpop.permute.xlu0 %482
  %485 = vset.pattern.permute.xlu0 3
  %486 = vperm.xlu0 %485, %v47
  %v487 = vpop.permute.xlu0 %486
  %489 = vset.pattern.permute.xlu0 3
  %490 = vperm.xlu0 %489, %v48
  %v491 = vpop.permute.xlu0 %490
  %493 = vset.pattern.permute.xlu0 3
  %494 = vperm.xlu0 %493, %v49
  %v495 = vpop.permute.xlu0 %494
  %497 = vset.pattern.permute.xlu0 3
  %498 = vperm.xlu0 %497, %v50
  %v499 = vpop.permute.xlu0 %498
  %501 = vset.pattern.permute.xlu0 3
  %502 = vperm.xlu0 %501, %v51
  %v503 = vpop.permute.xlu0 %502
  %505 = vset.pattern.permute.xlu0 3
  %506 = vperm.xlu0 %505, %v52
  %v507 = vpop.permute.xlu0 %506
  %509 = vset.pattern.permute.xlu0 3
  %510 = vperm.xlu0 %509, %v53
  %v511 = vpop.permute.xlu0 %510
  %513 = vset.pattern.permute.xlu0 3
  %514 = vperm.xlu0 %513, %v54
  %v515 = vpop.permute.xlu0 %514
  %517 = vset.pattern.permute.xlu0 3
  %518 = vperm.xlu0 %517, %v55
  %v519 = vpop.permute.xlu0 %518
  %521 = vset.pattern.permute.xlu0 3
  %522 = vperm.xlu0 %521, %v56
  %v523 = vpop.permute.xlu0 %522
  %525 = vset.pattern.permute.xlu0 3
  %526 = vperm.xlu0 %525, %v57
  %v527 = vpop.permute.xlu0 %526
  %529 = vset.pattern.permute.xlu0 3
  %530 = vperm.xlu0 %529, %v58
  %v531 = vpop.permute.xlu0 %530
  %533 = vset.pattern.permute.xlu0 3
  %534 = vperm.xlu0 %533, %v59
  %v535 = vpop.permute.xlu0 %534
  %537 = vset.pattern.permute.xlu0 3
  %538 = vperm.xlu0 %537, %v60
  %v539 = vpop.permute.xlu0 %538
  %v541 = vlaneseq
  %v542 = vshrl.u32 %v541, 7
  %v543 = vsub.s32 3, %v542
  %v544 = vrot.slane %v61, %v543
  %v545 = vmul.f32 %v463, %v544
  %v546 = vmul.f32 %v467, %v544
  %v547 = vmul.f32 %v471, %v544
  %v548 = vmul.f32 %v475, %v544
  %v549 = vmul.f32 %v479, %v544
  %v550 = vmul.f32 %v483, %v544
  %v551 = vmul.f32 %v487, %v544
  %v552 = vmul.f32 %v491, %v544
  %v553 = vmul.f32 %v495, %v544
  %v554 = vmul.f32 %v499, %v544
  %v555 = vmul.f32 %v503, %v544
  %v556 = vmul.f32 %v507, %v544
  %v557 = vmul.f32 %v511, %v544
  %v558 = vmul.f32 %v515, %v544
  %v559 = vmul.f32 %v519, %v544
  %v560 = vmul.f32 %v523, %v544
  %v561 = vmul.f32 %v527, %v544
  %v562 = vmul.f32 %v531, %v544
  %v563 = vmul.f32 %v535, %v544
  %v564 = vmul.f32 %v539, %v544
  %v565 = vadd.f32 %v441, %v545
  %v566 = vadd.f32 %v442, %v546
  %v567 = vadd.f32 %v443, %v547
  %v568 = vadd.f32 %v444, %v548
  %v569 = vadd.f32 %v445, %v549
  %v570 = vadd.f32 %v446, %v550
  %v571 = vadd.f32 %v447, %v551
  %v572 = vadd.f32 %v448, %v552
  %v573 = vadd.f32 %v449, %v553
  %v574 = vadd.f32 %v450, %v554
  %v575 = vadd.f32 %v451, %v555
  %v576 = vadd.f32 %v452, %v556
  %v577 = vadd.f32 %v453, %v557
  %v578 = vadd.f32 %v454, %v558
  %v579 = vadd.f32 %v455, %v559
  %v580 = vadd.f32 %v456, %v560
  %v581 = vadd.f32 %v457, %v561
  %v582 = vadd.f32 %v458, %v562
  %v583 = vadd.f32 %v459, %v563
  %v584 = vadd.f32 %v460, %v564
  %v585 = vmax.f32 %v565, 0.0
  %v586 = vmax.f32 %v566, 0.0
  %v587 = vmax.f32 %v567, 0.0
  %v588 = vmax.f32 %v568, 0.0
  %v589 = vmax.f32 %v569, 0.0
  %v590 = vmax.f32 %v570, 0.0
  %v591 = vmax.f32 %v571, 0.0
  %v592 = vmax.f32 %v572, 0.0
  %v593 = vmax.f32 %v573, 0.0
  %v594 = vmax.f32 %v574, 0.0
  %v595 = vmax.f32 %v575, 0.0
  %v596 = vmax.f32 %v576, 0.0
  %v597 = vmax.f32 %v577, 0.0
  %v598 = vmax.f32 %v578, 0.0
  %v599 = vmax.f32 %v579, 0.0
  %v600 = vmax.f32 %v580, 0.0
  %v601 = vmax.f32 %v581, 0.0
  %v602 = vmax.f32 %v582, 0.0
  %v603 = vmax.f32 %v583, 0.0
  %v604 = vmax.f32 %v584, 0.0
  %v605 = vpack.c.bf16 %v586, %v585
  %v606 = vpack.c.bf16 %v588, %v587
  %v607 = vpack.c.bf16 %v590, %v589
  %v608 = vpack.c.bf16 %v592, %v591
  %v609 = vpack.c.bf16 %v594, %v593
  %v610 = vpack.c.bf16 %v596, %v595
  %v611 = vpack.c.bf16 %v598, %v597
  %v612 = vpack.c.bf16 %v600, %v599
  %v613 = vpack.c.bf16 %v602, %v601
  %v614 = vpack.c.bf16 %v604, %v603
  %v615 = vld [vmem:[%s3] sm:$0xf]
  %v616 = vld [vmem:[%s3 + $0x4] sm:$0xf]
  %v617 = vld [vmem:[%s3 + $0x8] sm:$0xf]
  %v618 = vld [vmem:[%s3 + $0xc] sm:$0xf]
  %v619 = vld [vmem:[%s3 + $0x10] sm:$0xf]
  %v620 = vld [vmem:[%s3 + $0x14] sm:$0xf]
  %v621 = vld [vmem:[%s3 + $0x18] sm:$0xf]
  %v622 = vld [vmem:[%s3 + $0x1c] sm:$0xf]
  %v623 = vld [vmem:[%s3 + $0x20] sm:$0xf]
  %v624 = vld [vmem:[%s3 + $0x24] sm:$0xf]
  %v625 = vld [vmem:[%s3 + $0x28] sm:$0xf]
  %v626 = vld [vmem:[%s3 + $0x2c] sm:$0xf]
  %v627 = vld [vmem:[%s3 + $0x30] sm:$0xf]
  %v628 = vld [vmem:[%s3 + $0x34] sm:$0xf]
  %v629 = vld [vmem:[%s3 + $0x38] sm:$0xf]
  %v630 = vld [vmem:[%s3 + $0x3c] sm:$0xf]
  %v631 = vld [vmem:[%s4] sm:$0x1]
  %v633 = vlaneseq
  %v634 = vshrl.u32 %v633, 7
  %v635 = vsub.s32 0, %v634
  %v636 = vrot.slane %v631, %v635
  %v654 = vunpack.c.l.b16 %v615
  %v655 = vunpack.c.l.b16 %v616
  %v656 = vunpack.c.l.b16 %v617
  %v657 = vunpack.c.l.b16 %v618
  %v658 = vunpack.c.l.b16 %v619
  %v659 = vunpack.c.l.b16 %v620
  %v660 = vunpack.c.l.b16 %v621
  %v661 = vunpack.c.l.b16 %v622
  %v662 = vunpack.c.l.b16 %v623
  %v663 = vunpack.c.l.b16 %v624
  %v664 = vunpack.c.l.b16 %v625
  %v665 = vunpack.c.l.b16 %v626
  %v666 = vunpack.c.l.b16 %v627
  %v667 = vunpack.c.l.b16 %v628
  %v668 = vunpack.c.l.b16 %v629
  %v669 = vunpack.c.l.b16 %v630
  %v670 = vpack.c.b16 %v655, %v654
  %v671 = vpack.c.b16 %v657, %v656
  %v672 = vpack.c.b16 %v659, %v658
  %v673 = vpack.c.b16 %v661, %v660
  %v674 = vpack.c.b16 %v663, %v662
  %v675 = vpack.c.b16 %v665, %v664
  %v676 = vpack.c.b16 %v667, %v666
  %v677 = vpack.c.b16 %v669, %v668
  %686 = vmatprep.subr.bf16.mxu0 0
  %687 = vmatpush1.bf16.msra.mxu0 %v677
  %688 = vmatprep.subr.bf16.mxu0 0
  %689 = vmatpush1.bf16.msra.mxu0 %v676
  %690 = vmatprep.subr.bf16.mxu0 0
  %691 = vmatpush1.bf16.msra.mxu0 %v675
  %692 = vmatprep.subr.bf16.mxu0 0
  %693 = vmatpush1.bf16.msra.mxu0 %v674
  %694 = vmatprep.subr.bf16.mxu0 0
  %695 = vmatpush1.bf16.msra.mxu0 %v673
  %696 = vmatprep.subr.bf16.mxu0 0
  %697 = vmatpush1.bf16.msra.mxu0 %v672
  %698 = vmatprep.subr.bf16.mxu0 0
  %699 = vmatpush1.bf16.msra.mxu0 %v671
  %700 = vmatprep.subr.bf16.mxu0 0
  %701 = vmatpush1.bf16.msra.mxu0 %v670
  %702 = vmatprep.subr.bf16.mxu0 0
  %703 = vmatpush2.bf16.msra.mxu0 0
  %704 = vmatprep.subr.bf16.mxu0 0
  %705 = vmatpush2.bf16.msra.mxu0 0
  %706 = vmatprep.subr.bf16.mxu0 0
  %707 = vmatpush2.bf16.msra.mxu0 0
  %708 = vmatprep.subr.bf16.mxu0 0
  %709 = vmatpush2.bf16.msra.mxu0 0
  %710 = vmatprep.subr.bf16.mxu0 0
  %711 = vmatpush2.bf16.msra.mxu0 0
  %712 = vmatprep.subr.bf16.mxu0 0
  %713 = vmatpush2.bf16.msra.mxu0 0
  %714 = vmatprep.subr.bf16.mxu0 0
  %715 = vmatpush2.bf16.msra.mxu0 0
  %716 = vmatprep.subr.bf16.mxu0 0
  %717 = vmatpush2.bf16.msra.mxu0 0
  %718 = vmatprep.mubr.bf16.mxu0 0
  %719 = vmatmul.mubr.bf16.gmra.mxu0 %v605
  %v720 = vpop.f32.mrf.mxu0
  %v721 = vadd.f32 %v636, %v720
  %v722 = vpop.f32.mrf.mxu0
  %v723 = vpop.f32.mrf.mxu0
  %v724 = vadd.f32 %v636, %v723
  %v725 = vpop.f32.mrf.mxu0
  %726 = vmatprep.mubr.bf16.mxu0 0
  %727 = vmatmul.mubr.bf16.gmra.mxu0 %v606
  %v728 = vpop.f32.mrf.mxu0
  %v729 = vadd.f32 %v636, %v728
  %v730 = vpop.f32.mrf.mxu0
  %v731 = vpop.f32.mrf.mxu0
  %v732 = vadd.f32 %v636, %v731
  %v733 = vpop.f32.mrf.mxu0
  %734 = vmatprep.mubr.bf16.mxu0 0
  %735 = vmatmul.mubr.bf16.gmra.mxu0 %v607
  %v736 = vpop.f32.mrf.mxu0
  %v737 = vadd.f32 %v636, %v736
  %v738 = vpop.f32.mrf.mxu0
  %v739 = vpop.f32.mrf.mxu0
  %v740 = vadd.f32 %v636, %v739
  %v741 = vpop.f32.mrf.mxu0
  %742 = vmatprep.mubr.bf16.mxu0 0
  %743 = vmatmul.mubr.bf16.gmra.mxu0 %v608
  %v744 = vpop.f32.mrf.mxu0
  %v745 = vadd.f32 %v636, %v744
  %v746 = vpop.f32.mrf.mxu0
  %v747 = vpop.f32.mrf.mxu0
  %v748 = vadd.f32 %v636, %v747
  %v749 = vpop.f32.mrf.mxu0
  %750 = vmatprep.mubr.bf16.mxu0 0
  %751 = vmatmul.mubr.bf16.gmra.mxu0 %v609
  %v752 = vpop.f32.mrf.mxu0
  %v753 = vadd.f32 %v636, %v752
  %v754 = vpop.f32.mrf.mxu0
  %v755 = vpop.f32.mrf.mxu0
  %v756 = vadd.f32 %v636, %v755
  %v757 = vpop.f32.mrf.mxu0
  %758 = vmatprep.mubr.bf16.mxu0 0
  %759 = vmatmul.mubr.bf16.gmra.mxu0 %v610
  %v760 = vpop.f32.mrf.mxu0
  %v761 = vadd.f32 %v636, %v760
  %v762 = vpop.f32.mrf.mxu0
  %v763 = vpop.f32.mrf.mxu0
  %v764 = vadd.f32 %v636, %v763
  %v765 = vpop.f32.mrf.mxu0
  %766 = vmatprep.mubr.bf16.mxu0 0
  %767 = vmatmul.mubr.bf16.gmra.mxu0 %v611
  %v768 = vpop.f32.mrf.mxu0
  %v769 = vadd.f32 %v636, %v768
  %v770 = vpop.f32.mrf.mxu0
  %v771 = vpop.f32.mrf.mxu0
  %v772 = vadd.f32 %v636, %v771
  %v773 = vpop.f32.mrf.mxu0
  %774 = vmatprep.mubr.bf16.mxu0 0
  %775 = vmatmul.mubr.bf16.gmra.mxu0 %v612
  %v776 = vpop.f32.mrf.mxu0
  %v777 = vadd.f32 %v636, %v776
  %v778 = vpop.f32.mrf.mxu0
  %v779 = vpop.f32.mrf.mxu0
  %v780 = vadd.f32 %v636, %v779
  %v781 = vpop.f32.mrf.mxu0
  %782 = vmatprep.mubr.bf16.mxu0 0
  %783 = vmatmul.mubr.bf16.gmra.mxu0 %v613
  %v784 = vpop.f32.mrf.mxu0
  %v785 = vadd.f32 %v636, %v784
  %v786 = vpop.f32.mrf.mxu0
  %v787 = vpop.f32.mrf.mxu0
  %v788 = vadd.f32 %v636, %v787
  %v789 = vpop.f32.mrf.mxu0
  %790 = vmatprep.mubr.bf16.mxu0 0
  %791 = vmatmul.mubr.bf16.gmra.mxu0 %v614
  %v792 = vpop.f32.mrf.mxu0
  %v793 = vadd.f32 %v636, %v792
  %v794 = vpop.f32.mrf.mxu0
  %v795 = vpop.f32.mrf.mxu0
  %v796 = vadd.f32 %v636, %v795
  %v797 = vpop.f32.mrf.mxu0
  %798 = vdwg.mxu0
  %v799 = vpack.c.bf16 %v724, %v721
  %v800 = vpack.c.bf16 %v732, %v729
  %v801 = vpack.c.bf16 %v740, %v737
  %v802 = vpack.c.bf16 %v748, %v745
  %v803 = vpack.c.bf16 %v756, %v753
  %v804 = vpack.c.bf16 %v764, %v761
  %v805 = vpack.c.bf16 %v772, %v769
  %v806 = vpack.c.bf16 %v780, %v777
  %v807 = vpack.c.bf16 %v788, %v785
  %v808 = vpack.c.bf16 %v796, %v793
  %v819 = vunpack.c.l.b16 %v799
  %v820 = vunpack.c.h.b16 %v799
  %v821 = vunpack.c.l.b16 %v800
  %v822 = vunpack.c.h.b16 %v800
  %v823 = vunpack.c.l.b16 %v801
  %v824 = vunpack.c.h.b16 %v801
  %v825 = vunpack.c.l.b16 %v802
  %v826 = vunpack.c.h.b16 %v802
  %v827 = vunpack.c.l.b16 %v803
  %v828 = vunpack.c.h.b16 %v803
  %v829 = vunpack.c.l.b16 %v804
  %v830 = vunpack.c.h.b16 %v804
  %v831 = vunpack.c.l.b16 %v805
  %v832 = vunpack.c.h.b16 %v805
  %v833 = vunpack.c.l.b16 %v806
  %v834 = vunpack.c.h.b16 %v806
  %v835 = vunpack.c.l.b16 %v807
  %v836 = vunpack.c.h.b16 %v807
  %v837 = vunpack.c.l.b16 %v808
  %v838 = vunpack.c.h.b16 %v808
  %v839 = vpack.c.b16 %v819, %v819
  %v840 = vpack.c.b16 %v820, %v820
  %v841 = vpack.c.b16 %v821, %v821
  %v842 = vpack.c.b16 %v822, %v822
  %v843 = vpack.c.b16 %v823, %v823
  %v844 = vpack.c.b16 %v824, %v824
  %v845 = vpack.c.b16 %v825, %v825
  %v846 = vpack.c.b16 %v826, %v826
  %v847 = vpack.c.b16 %v827, %v827
  %v848 = vpack.c.b16 %v828, %v828
  %v849 = vpack.c.b16 %v829, %v829
  %v850 = vpack.c.b16 %v830, %v830
  %v851 = vpack.c.b16 %v831, %v831
  %v852 = vpack.c.b16 %v832, %v832
  %v853 = vpack.c.b16 %v833, %v833
  %v854 = vpack.c.b16 %v834, %v834
  %v855 = vpack.c.b16 %v835, %v835
  %v856 = vpack.c.b16 %v836, %v836
  %v857 = vpack.c.b16 %v837, %v837
  %v858 = vpack.c.b16 %v838, %v838
  %879 = vst [vmem:[%s5] sm:$0xf] %v839
  %880 = vst [vmem:[%s5 + $0x4] sm:$0xf] %v840
  %881 = vst [vmem:[%s5 + $0x8] sm:$0xf] %v841
  %882 = vst [vmem:[%s5 + $0xc] sm:$0xf] %v842
  %883 = vst [vmem:[%s5 + $0x10] sm:$0xf] %v843
  %884 = vst [vmem:[%s5 + $0x14] sm:$0xf] %v844
  %885 = vst [vmem:[%s5 + $0x18] sm:$0xf] %v845
  %886 = vst [vmem:[%s5 + $0x1c] sm:$0xf] %v846
  %887 = vst [vmem:[%s5 + $0x20] sm:$0xf] %v847
  %888 = vst [vmem:[%s5 + $0x24] sm:$0xf] %v848
  %889 = vst [vmem:[%s5 + $0x28] sm:$0xf] %v849
  %890 = vst [vmem:[%s5 + $0x2c] sm:$0xf] %v850
  %891 = vst [vmem:[%s5 + $0x30] sm:$0xf] %v851
  %892 = vst [vmem:[%s5 + $0x34] sm:$0xf] %v852
  %893 = vst [vmem:[%s5 + $0x38] sm:$0xf] %v853
  %894 = vst [vmem:[%s5 + $0x3c] sm:$0xf] %v854
  %895 = vst [vmem:[%s5 + $0x40] sm:$0xf] %v855
  %896 = vst [vmem:[%s5 + $0x44] sm:$0xf] %v856
  %897 = vst [vmem:[%s5 + $0x48] sm:$0xf] %v857
  %898 = vst [vmem:[%s5 + $0x4c] sm:$0xf] %v858
  // Predicated region
  $region22: #{fcos_forward.1} parent=0 // pred_check
    _
  $region23: #{fcos_forward.1} parent=0 // pred_check_branch
    %900 = sbr.rel (0) target = $region25
  $region24: #{fcos_forward.1} parent=0 // pred_region
    _
  $region25: #{fcos_forward.1} parent=0 // pred_fallthru
    _
  // Predicated region
  $region26: #{fcos_forward.1} parent=0 // pred_check
    _
  $region27: #{fcos_forward.1} parent=0 // pred_check_branch
    %902 = sbr.rel (0) target = $region29
  $region28: #{fcos_forward.1} parent=0 // pred_region
    _
  $region29: #{fcos_forward.1} parent=0 // pred_fallthru
    _

</llo_original>
